<compile_context>
chip_gen: v6e
topology: v6e:2x2x1
jax: 0.10.0
libtpu: 0.0.40
codegen_flags: <defaults>
</compile_context>

<pallas_src>
import math

import jax
import jax.numpy as jnp
from jax.experimental import pallas as pl
from jax.experimental.pallas import tpu as pltpu


def _disc_kernel(x_ref, xt_ref, w1a_ref, w1b_ref, b1_ref, w2_ref, b2_ref, out_ref):
    # Layer 1: h = ReLU([x | x_tild] @ W1 + b1), concat fused into two
    # accumulated MXU dots.
    h = jnp.dot(x_ref[...], w1a_ref[...], preferred_element_type=jnp.float32)
    h = h + jnp.dot(xt_ref[...], w1b_ref[...], preferred_element_type=jnp.float32)
    h = jnp.maximum(h + b1_ref[...], 0.0)          # bias broadcast (1, 4D) + ReLU
    # (Dropout(0.5) is identity in eval mode -- see module-level TODO.)
    # Layer 2 as VPU multiply + lane reduction instead of an N=1 MXU matmul.
    p = jnp.sum(h * w2_ref[...], axis=-1, keepdims=True)      # (TB, 1)
    out_ref[...] = p + b2_ref[0, 0]                            # scalar bias from SMEM


def _round_up(n, m):
    return ((n + m - 1) // m) * m


def discriminator_forward(x, x_tild, w1, b1, w2, b2, *, batch_tile=512):
    """x, x_tild: (B, D) f32. w1: (2D, 4D), b1: (1, 4D), w2: (4D, 1), b2: (1, 1).

    Returns (B,) f32 logits (eval-mode forward of the TNC Discriminator).
    """
    B, D = x.shape
    H = 4 * D

    # Batch tile: multiple of 8 (sublane alignment), capped at `batch_tile`.
    TB = min(int(batch_tile), _round_up(B, 8))
    B_pad = _round_up(B, TB)
    num_tiles = B_pad // TB
    if B_pad != B:
        pad = ((0, B_pad - B), (0, 0))
        x = jnp.pad(x, pad)
        x_tild = jnp.pad(x_tild, pad)

    # Pre-split W1 so torch's cat([x, x_tild], -1) is fused into the kernel.
    w1a = w1[:D, :]                    # (D, 4D), acts on x
    w1b = w1[D:, :]                    # (D, 4D), acts on x_tild
    b1_row = b1.reshape(1, H)
    w2_row = w2.reshape(1, H)          # lane-oriented for VPU mul + reduce
    b2_s = b2.reshape(1, 1)            # scalar, goes to SMEM

    # Advisory cost for XLA scheduling around the custom call.
    flops = 2 * B_pad * (2 * D) * H + 4 * B_pad * H
    bytes_accessed = 4 * (2 * B_pad * D + 2 * D * H + 2 * H + 1 + B_pad)

    # VMEM budget: double-buffered activations/output + resident weights.
    vmem_need = 4 * (2 * 2 * TB * D          # x, x_tild tiles (double-buffered)
                     + 2 * D * H + 2 * H     # w1a, w1b, b1, w2_row (resident)
                     + 2 * TB                # output column (double-buffered)
                     + TB * H)               # layer-1 activations
    vmem_limit = int(min(max(2 * vmem_need, 16 << 20), 64 << 20))

    out = pl.pallas_call(
        _disc_kernel,
        out_shape=jax.ShapeDtypeStruct((B_pad, 1), jnp.float32),
        grid_spec=pltpu.PrefetchScalarGridSpec(
            num_scalar_prefetch=0,
            grid=(num_tiles,),
            in_specs=[
                pl.BlockSpec((TB, D), lambda i: (i, 0)),            # x tile
                pl.BlockSpec((TB, D), lambda i: (i, 0)),            # x_tild tile
                pl.BlockSpec((D, H), lambda i: (0, 0)),             # W1 top half
                pl.BlockSpec((D, H), lambda i: (0, 0)),             # W1 bottom half
                pl.BlockSpec((1, H), lambda i: (0, 0)),             # b1
                pl.BlockSpec((1, H), lambda i: (0, 0)),             # w2 row
                pl.BlockSpec(memory_space=pltpu.MemorySpace.SMEM),  # b2 scalar
            ],
            out_specs=pl.BlockSpec((TB, 1), lambda i: (i, 0)),
        ),
        compiler_params=pltpu.CompilerParams(
            dimension_semantics=("parallel",),   # independent row blocks -> 2 TCs on v7x
            vmem_limit_bytes=vmem_limit,
        ),
        cost_estimate=pl.CostEstimate(
            flops=flops, transcendentals=0, bytes_accessed=bytes_accessed),
    )(x, x_tild, w1a, w1b, b1_row, w2_row, b2_s)

    return out.reshape((-1,))[:B]


def _xavier_uniform(key, fan_in, fan_out):
    # Matches torch.nn.init.xavier_uniform_ (gain=1.0); stored as (in, out) so
    # the kernel computes x @ W.
    bound = math.sqrt(6.0 / (fan_in + fan_out))
    return jax.random.uniform(
        key, (fan_in, fan_out), dtype=jnp.float32, minval=-bound, maxval=bound
    )


def init_params(key, input_size):
    k1, k2 = jax.random.split(key)
    w1 = _xavier_uniform(k1, 2 * input_size, 4 * input_size)     # Linear(2D, 4D)
    b1 = jnp.zeros((1, 4 * input_size), dtype=jnp.float32)       # torch bias init != 0;
    w2 = _xavier_uniform(k2, 4 * input_size, 1)                  # Linear(4D, 1)
    b2 = jnp.zeros((1, 1), dtype=jnp.float32)                    # zeros used for determinism
    return w1, b1, w2, b2


def _reference(x, x_tild, w1, b1, w2, b2):
    x_all = jnp.concatenate([x, x_tild], axis=-1)
    h = jnp.maximum(x_all @ w1 + b1, 0.0)
    return (h @ w2 + b2).reshape((-1,))


if __name__ == "__main__":
    input_size = 32   # D
    batch = 8         # B

    key = jax.random.PRNGKey(0)
    kx, kxt, kp, kx2, kxt2 = jax.random.split(key, 5)

    x = jax.random.normal(kx, (batch, input_size), dtype=jnp.float32)
    x_tild = jax.random.normal(kxt, (batch, input_size), dtype=jnp.float32)
    w1, b1, w2, b2 = init_params(kp, input_size)

    # Single-tile case (B=8 -> grid=(1,)).
    p = discriminator_forward(x, x_tild, w1, b1, w2, b2)
    p = jax.block_until_ready(p)
    p_ref = _reference(x, x_tild, w1, b1, w2, b2)
    assert p.shape == (batch,)
    assert jnp.allclose(p, p_ref, atol=1e-5, rtol=1e-5), "mismatch vs reference (B=8)"

    # Multi-tile case with padding (B=20, TB=8 -> grid=(3,), 4 padded rows).
    batch2 = 20
    x2 = jax.random.normal(kx2, (batch2, input_size), dtype=jnp.float32)
    xt2 = jax.random.normal(kxt2, (batch2, input_size), dtype=jnp.float32)
    p2 = discriminator_forward(x2, xt2, w1, b1, w2, b2, batch_tile=8)
    p2 = jax.block_until_ready(p2)
    p2_ref = _reference(x2, xt2, w1, b1, w2, b2)
    assert p2.shape == (batch2,)
    assert jnp.allclose(p2, p2_ref, atol=1e-5, rtol=1e-5), "mismatch vs reference (B=20)"

    print("KERNEL_OK")
</pallas_src>

<mosaic_0001>
module attributes {stable_mosaic.version = 11 : i64} {
  func.func @_disc_kernel(%arg0: i32, %arg1: memref<8x32xf32, #tpu.memory_space<vmem>>, %arg2: memref<8x32xf32, #tpu.memory_space<vmem>>, %arg3: memref<32x128xf32, #tpu.memory_space<vmem>>, %arg4: memref<32x128xf32, #tpu.memory_space<vmem>>, %arg5: memref<1x128xf32, #tpu.memory_space<vmem>>, %arg6: memref<1x128xf32, #tpu.memory_space<vmem>>, %arg7: memref<1x1xf32, #tpu.memory_space<smem>>, %arg8: memref<8x1xf32, #tpu.memory_space<vmem>>) attributes {dimension_semantics = [#tpu.dimension_semantics<parallel>], iteration_bounds = array<i64: 1>, scalar_prefetch = 0 : i64, scratch_operands = 0 : i64, tpu.core_type = #tpu.core_type<tc>, window_params = [{transform_indices = @transform_0, window_bounds = array<i64: 8, 32>}, {transform_indices = @transform_1, window_bounds = array<i64: 8, 32>}, {pipeline_mode = #tpu.pipeline_mode<synchronous>, transform_indices = @transform_2, window_bounds = array<i64: 32, 128>}, {pipeline_mode = #tpu.pipeline_mode<synchronous>, transform_indices = @transform_3, window_bounds = array<i64: 32, 128>}, {pipeline_mode = #tpu.pipeline_mode<synchronous>, transform_indices = @transform_4, window_bounds = array<i64: 1, 128>}, {pipeline_mode = #tpu.pipeline_mode<synchronous>, transform_indices = @transform_5, window_bounds = array<i64: 1, 128>}, {transform_indices = @transform_6, window_bounds = array<i64: 1, 1>}, {transform_indices = @transform_7, window_bounds = array<i64: 8, 1>}]} {
    %c0 = arith.constant 0 : index
    %c0_0 = arith.constant 0 : index
    %0 = vector.load %arg1[%c0, %c0_0] : memref<8x32xf32, #tpu.memory_space<vmem>>, vector<8x32xf32>
    %c0_1 = arith.constant 0 : index
    %c0_2 = arith.constant 0 : index
    %1 = vector.load %arg3[%c0_1, %c0_2] : memref<32x128xf32, #tpu.memory_space<vmem>>, vector<32x128xf32>
    %cst = arith.constant dense<0.000000e+00> : vector<8x128xf32>
    %2 = tpu.matmul %0, %1, %cst {dimension_numbers = #tpu.dot_dimension_numbers<[1], [0], [0], [1], [0, 0, 1, 1], [], []>} : vector<8x32xf32>, vector<32x128xf32>, vector<8x128xf32> -> vector<8x128xf32>
    %c0_3 = arith.constant 0 : index
    %c0_4 = arith.constant 0 : index
    %3 = vector.load %arg2[%c0_3, %c0_4] : memref<8x32xf32, #tpu.memory_space<vmem>>, vector<8x32xf32>
    %c0_5 = arith.constant 0 : index
    %c0_6 = arith.constant 0 : index
    %4 = vector.load %arg4[%c0_5, %c0_6] : memref<32x128xf32, #tpu.memory_space<vmem>>, vector<32x128xf32>
    %cst_7 = arith.constant dense<0.000000e+00> : vector<8x128xf32>
    %5 = tpu.matmul %3, %4, %cst_7 {dimension_numbers = #tpu.dot_dimension_numbers<[1], [0], [0], [1], [0, 0, 1, 1], [], []>} : vector<8x32xf32>, vector<32x128xf32>, vector<8x128xf32> -> vector<8x128xf32>
    %6 = arith.addf %2, %5 : vector<8x128xf32>
    %c0_8 = arith.constant 0 : index
    %c0_9 = arith.constant 0 : index
    %7 = vector.load %arg5[%c0_8, %c0_9] : memref<1x128xf32, #tpu.memory_space<vmem>>, vector<1x128xf32>
    %8 = vector.broadcast %7 : vector<1x128xf32> to vector<8x128xf32>
    %9 = arith.addf %6, %8 : vector<8x128xf32>
    %cst_10 = arith.constant 0.000000e+00 : f32
    %10 = vector.broadcast %cst_10 : f32 to vector<8x128xf32>
    %11 = arith.maximumf %9, %10 : vector<8x128xf32>
    %c0_11 = arith.constant 0 : index
    %c0_12 = arith.constant 0 : index
    %12 = vector.load %arg6[%c0_11, %c0_12] : memref<1x128xf32, #tpu.memory_space<vmem>>, vector<1x128xf32>
    %13 = vector.broadcast %12 : vector<1x128xf32> to vector<8x128xf32>
    %14 = arith.mulf %11, %13 : vector<8x128xf32>
    %cst_13 = arith.constant dense<0.000000e+00> : vector<8xf32>
    %15 = vector.multi_reduction <add>, %14, %cst_13 [1] : vector<8x128xf32> to vector<8xf32>
    %16 = vector.shape_cast %15 : vector<8xf32> to vector<8x1xf32>
    %c0_14 = arith.constant 0 : index
    %c0_15 = arith.constant 0 : index
    %17 = memref.load %arg7[%c0_14, %c0_15] : memref<1x1xf32, #tpu.memory_space<smem>>
    %18 = vector.broadcast %17 : f32 to vector<8x1xf32>
    %19 = arith.addf %16, %18 : vector<8x1xf32>
    %c0_16 = arith.constant 0 : index
    %c0_17 = arith.constant 0 : index
    %20 = vector.load %arg8[%c0_16, %c0_17] : memref<8x1xf32, #tpu.memory_space<vmem>>, vector<8x1xf32>
    tpu.vector_store %arg8[%c0_16, %c0_17], %19 {strides = array<i32>} : memref<8x1xf32, #tpu.memory_space<vmem>>, vector<8x1xf32>,
    return
  }
  func.func @transform_0(%arg0: i32) -> (i32, i32) {
    %c0_i32 = arith.constant 0 : i32
    %c0_i32_0 = arith.constant 0 : i32
    return %arg0, %c0_i32 : i32, i32
  }
  func.func @transform_1(%arg0: i32) -> (i32, i32) {
    %c0_i32 = arith.constant 0 : i32
    %c0_i32_0 = arith.constant 0 : i32
    return %arg0, %c0_i32 : i32, i32
  }
  func.func @transform_2(%arg0: i32) -> (i32, i32) {
    %c0_i32 = arith.constant 0 : i32
    %c0_i32_0 = arith.constant 0 : i32
    %c0_i32_1 = arith.constant 0 : i32
    return %c0_i32, %c0_i32_0 : i32, i32
  }
  func.func @transform_3(%arg0: i32) -> (i32, i32) {
    %c0_i32 = arith.constant 0 : i32
    %c0_i32_0 = arith.constant 0 : i32
    %c0_i32_1 = arith.constant 0 : i32
    return %c0_i32, %c0_i32_0 : i32, i32
  }
  func.func @transform_4(%arg0: i32) -> (i32, i32) {
    %c0_i32 = arith.constant 0 : i32
    %c0_i32_0 = arith.constant 0 : i32
    %c0_i32_1 = arith.constant 0 : i32
    return %c0_i32, %c0_i32_0 : i32, i32
  }
  func.func @transform_5(%arg0: i32) -> (i32, i32) {
    %c0_i32 = arith.constant 0 : i32
    %c0_i32_0 = arith.constant 0 : i32
    %c0_i32_1 = arith.constant 0 : i32
    return %c0_i32, %c0_i32_0 : i32, i32
  }
  func.func @transform_6(%arg0: i32) -> (i32, i32) {
    %c0_i32 = arith.constant 0 : i32
    %c0_i32_0 = arith.constant 0 : i32
    %c0_i32_1 = arith.constant 0 : i32
    return %c0_i32, %c0_i32_0 : i32, i32
  }
  func.func @transform_7(%arg0: i32) -> (i32, i32) {
    %c0_i32 = arith.constant 0 : i32
    %c0_i32_0 = arith.constant 0 : i32
    return %arg0, %c0_i32 : i32, i32
  }
}

</mosaic_0001>

<llo_original>
// kernel: tpu_custom_call.1
$region0: #{tpu_custom_call.1}
  #allocation0 [shape = 'u32[]', space=smem, size = 0x4, offset = 0x4, fixed_abs, tag = 'smem constant byte address 0x4 - core index']
  #allocation1 [shape = 'u32[144,128]{1,0:T(1,128)}', space=vmem, size = 0x12000, scoped, tag = 'internal scratch']
  #allocation2 [shape = 'f32[1,1]{1,0:T(1,128)S(6)}', space=smem, size = 0x200, scoped, tag = 'scoped memory for tpu_custom_call.1']
  %s0 = inlined_call_operand.hbm [shape: f32[8,32], index: 0, kind: input, shape index: {}]
  %s1 = inlined_call_operand.hbm [shape: f32[8,32], index: 1, kind: input, shape index: {}]
  %s2 = inlined_call_operand.hbm [shape: f32[32,128], index: 2, kind: input, shape index: {}]
  %s3 = inlined_call_operand.hbm [shape: f32[32,128], index: 3, kind: input, shape index: {}]
  %s4 = inlined_call_operand.vmem [shape: f32[1,128], index: 4, kind: input, shape index: {}]
  %s5 = inlined_call_operand.vmem [shape: f32[1,128], index: 5, kind: input, shape index: {}]
  %s6 = inlined_call_operand.<no memory space> [shape: f32[1,1], index: 6, kind: input, shape index: {}]
  %s7 = inlined_call_operand.vmem [shape: f32[8,1], index: 7, kind: output, shape index: {}]
  %s8 = sld [smem:[#allocation0]]
  $region54: #{tpu_custom_call.1} parent=0
    _
  %s10 = ssub.s32 1, %s8
  %s11 = scalar_select 0, %s10, %s8
  %12 = sst [smem:[#allocation2]] %s6
  $region1: #{tpu_custom_call.1} parent=0
    #allocation3 [shape = 'u8[4096]{0}', space=vmem, size = 0x1000, scoped, tag = 'input window, operand 0, single buffered']
    #allocation4 [shape = 's32[1]{0}', space=sflag, size = 0x4, scoped, tag = 'scoped memory for tpu_custom_call.1']
    #allocation5 [shape = 'u8[4096]{0}', space=vmem, size = 0x1000, scoped, tag = 'input window, operand 1, single buffered']
    #allocation6 [shape = 's32[1]{0}', space=sflag, size = 0x4, scoped, tag = 'scoped memory for tpu_custom_call.1']
    #allocation7 [shape = 'u8[16384]{0}', space=vmem, size = 0x4000, scoped, tag = 'input window, operand 2, single buffered']
    #allocation8 [shape = 'u8[16384]{0}', space=vmem, size = 0x4000, scoped, tag = 'input window, operand 3, single buffered']
    #allocation9 [shape = 's32[1]{0}', space=sflag, size = 0x4, scoped, tag = 'scoped memory for tpu_custom_call.1']
    %13 = vsyncpa [#allocation4], 0
    %14 = vsyncpa [#allocation6], 0
    %15 = vsyncpa [#allocation9], 0
    // Predicated region
    $region2: #{tpu_custom_call.1} parent=1 // pred_check
      _
    $region3: #{tpu_custom_call.1} parent=1 // pred_check_branch
      %17 = sbr.rel (0) target = $region5
    $region4: #{tpu_custom_call.1} parent=1 // pred_region
      %s19 = ssub.s32 128, 128
      %20 = vsyncadd [#allocation4], %s19
      %s22 = sshll.u32 [#allocation3], 4
      %s23 = int_to_ptr.vmem [resolvable:$true] %s22
      %25 = dma.hbm_to_vmem [thread:$0]  %s0, 128, %s23, [#allocation4]
    $region5: #{tpu_custom_call.1} parent=1 // pred_fallthru
      _
    // Predicated region
    $region6: #{tpu_custom_call.1} parent=1 // pred_check
      _
    $region7: #{tpu_custom_call.1} parent=1 // pred_check_branch
      %27 = sbr.rel (0) target = $region9
    $region8: #{tpu_custom_call.1} parent=1 // pred_region
      %s29 = ssub.s32 128, 128
      %30 = vsyncadd [#allocation6], %s29
      %s32 = sshll.u32 [#allocation5], 4
      %s33 = int_to_ptr.vmem [resolvable:$true] %s32
      %35 = dma.hbm_to_vmem [thread:$0]  %s1, 128, %s33, [#allocation6]
    $region9: #{tpu_custom_call.1} parent=1 // pred_fallthru
      _
    // Predicated region
    $region10: #{tpu_custom_call.1} parent=1 // pred_check
      _
    $region11: #{tpu_custom_call.1} parent=1 // pred_check_branch
      %37 = sbr.rel (0) target = $region13
    $region12: #{tpu_custom_call.1} parent=1 // pred_region
      %s39 = ssub.s32 512, 512
      %40 = vsyncadd [#allocation6], %s39
      %s41 = sshll.u32 [#allocation7], 4
      %s42 = int_to_ptr.vmem [resolvable:$true] %s41
      %47 = dma.hbm_to_vmem [thread:$0]  %s2, 512, %s42, [#allocation6], 128, 128, 8
    $region13: #{tpu_custom_call.1} parent=1 // pred_fallthru
      _
    // Predicated region
    $region14: #{tpu_custom_call.1} parent=1 // pred_check
      _
    $region15: #{tpu_custom_call.1} parent=1 // pred_check_branch
      %49 = sbr.rel (0) target = $region17
    $region16: #{tpu_custom_call.1} parent=1 // pred_region
      %s51 = ssub.s32 512, 512
      %52 = vsyncadd [#allocation9], %s51
      %s53 = sshll.u32 [#allocation8], 4
      %s54 = int_to_ptr.vmem [resolvable:$true] %s53
      %59 = dma.hbm_to_vmem [thread:$0]  %s3, 512, %s54, [#allocation9], 128, 128, 8
    $region17: #{tpu_custom_call.1} parent=1 // pred_fallthru
      _
    // Predicated region
    $region18: #{tpu_custom_call.1} parent=1 // pred_check
      _
    $region19: #{tpu_custom_call.1} parent=1 // pred_check_branch
      %61 = sbr.rel (0) target = $region21
    $region20: #{tpu_custom_call.1} parent=1 // pred_region
      _
    $region21: #{tpu_custom_call.1} parent=1 // pred_fallthru
      _
    // Predicated region
    $region22: #{tpu_custom_call.1} parent=1 // pred_check
      _
    $region23: #{tpu_custom_call.1} parent=1 // pred_check_branch
      %63 = sbr.rel (0) target = $region25
    $region24: #{tpu_custom_call.1} parent=1 // pred_region
      _
    $region25: #{tpu_custom_call.1} parent=1 // pred_fallthru
      _
    // Predicated region
    $region26: #{tpu_custom_call.1} parent=1 // pred_check
      _
    $region27: #{tpu_custom_call.1} parent=1 // pred_check_branch
      %65 = sbr.rel (0) target = $region29
    $region28: #{tpu_custom_call.1} parent=1 // pred_region
      _
    $region29: #{tpu_custom_call.1} parent=1 // pred_fallthru
      _
    // Predicated region
    $region30: #{tpu_custom_call.1} parent=1 // pred_check
      _
    $region31: #{tpu_custom_call.1} parent=1 // pred_check_branch
      %67 = sbr.rel (0) target = $region33
    $region32: #{tpu_custom_call.1} parent=1 // pred_region
      %68 = dma.done [#allocation4], 128
    $region33: #{tpu_custom_call.1} parent=1 // pred_fallthru
      _
    // Predicated region
    $region34: #{tpu_custom_call.1} parent=1 // pred_check
      _
    $region35: #{tpu_custom_call.1} parent=1 // pred_check_branch
      %70 = sbr.rel (0) target = $region37
    $region36: #{tpu_custom_call.1} parent=1 // pred_region
      %71 = dma.done [#allocation6], 128
    $region37: #{tpu_custom_call.1} parent=1 // pred_fallthru
      _
    // Predicated region
    $region38: #{tpu_custom_call.1} parent=1 // pred_check
      _
    $region39: #{tpu_custom_call.1} parent=1 // pred_check_branch
      %73 = sbr.rel (0) target = $region41
    $region40: #{tpu_custom_call.1} parent=1 // pred_region
      %74 = dma.done [#allocation6], 512
    $region41: #{tpu_custom_call.1} parent=1 // pred_fallthru
      _
    // Predicated region
    $region42: #{tpu_custom_call.1} parent=1 // pred_check
      _
    $region43: #{tpu_custom_call.1} parent=1 // pred_check_branch
      %76 = sbr.rel (0) target = $region45
    $region44: #{tpu_custom_call.1} parent=1 // pred_region
      %77 = dma.done [#allocation9], 512
    $region45: #{tpu_custom_call.1} parent=1 // pred_fallthru
      _
    %v78 = vld [vmem:[#allocation3] sm:$0xff]
    %v79 = vld [vmem:[#allocation7] sm:$0xff]
    %v80 = vld [vmem:[#allocation7 + $0x8] sm:$0xff]
    %v81 = vld [vmem:[#allocation7 + $0x10] sm:$0xff]
    %v82 = vld [vmem:[#allocation7 + $0x18] sm:$0xff]
    %v83 = vld [vmem:[#allocation5] sm:$0xff]
    %v84 = vld [vmem:[#allocation8] sm:$0xff]
    %v85 = vld [vmem:[#allocation8 + $0x8] sm:$0xff]
    %v86 = vld [vmem:[#allocation8 + $0x10] sm:$0xff]
    %v87 = vld [vmem:[#allocation8 + $0x18] sm:$0xff]
    %vm88 = vcmask 261120
    %v90 = vsel %vm88, %v83, 0
    %92 = vmatprep.subr.mxu0 0.0
    %93 = vmatpush1.msra.mxu0 0.0
    %94 = vmatprep.subr.mxu0 0.0
    %95 = vmatpush1.msra.mxu0 0.0
    %96 = vmatprep.subr.mxu0 0.0
    %97 = vmatpush1.msra.mxu0 0.0
    %98 = vmatprep.subr.mxu0 0.0
    %99 = vmatpush1.msra.mxu0 0.0
    %100 = vmatprep.subr.mxu0 0.0
    %101 = vmatpush1.msra.mxu0 0.0
    %102 = vmatprep.subr.mxu0 0.0
    %103 = vmatpush1.msra.mxu0 0.0
    %104 = vmatprep.subr.mxu0 0.0
    %105 = vmatpush1.msra.mxu0 0.0
    %106 = vmatprep.subr.mxu0 0.0
    %107 = vmatpush1.msra.mxu0 0.0
    %108 = vmatprep.subr.mxu0 0.0
    %109 = vmatpush1.msra.mxu0 0.0
    %110 = vmatprep.subr.mxu0 0.0
    %111 = vmatpush1.msra.mxu0 0.0
    %112 = vmatprep.subr.mxu0 0.0
    %113 = vmatpush1.msra.mxu0 0.0
    %114 = vmatprep.subr.mxu0 0.0
    %115 = vmatpush1.msra.mxu0 0.0
    %116 = vmatprep.subr.mxu0 0.0
    %117 = vmatpush1.msra.mxu0 %v87
    %118 = vmatprep.subr.mxu0 0.0
    %119 = vmatpush1.msra.mxu0 %v86
    %120 = vmatprep.subr.mxu0 0.0
    %121 = vmatpush1.msra.mxu0 %v85
    %122 = vmatprep.subr.mxu0 0.0
    %123 = vmatpush1.msra.mxu0 %v84
    %124 = vmatprep.subr.mxu0 0.0
    %125 = vmatpush2.msra.mxu0 0.0
    %126 = vmatprep.subr.mxu0 0.0
    %127 = vmatpush2.msra.mxu0 0.0
    %128 = vmatprep.subr.mxu0 0.0
    %129 = vmatpush2.msra.mxu0 0.0
    %130 = vmatprep.subr.mxu0 0.0
    %131 = vmatpush2.msra.mxu0 0.0
    %132 = vmatprep.subr.mxu0 0.0
    %133 = vmatpush2.msra.mxu0 0.0
    %134 = vmatprep.subr.mxu0 0.0
    %135 = vmatpush2.msra.mxu0 0.0
    %136 = vmatprep.subr.mxu0 0.0
    %137 = vmatpush2.msra.mxu0 0.0
    %138 = vmatprep.subr.mxu0 0.0
    %139 = vmatpush2.msra.mxu0 0.0
    %140 = vmatprep.subr.mxu0 0.0
    %141 = vmatpush2.msra.mxu0 0.0
    %142 = vmatprep.subr.mxu0 0.0
    %143 = vmatpush2.msra.mxu0 0.0
    %144 = vmatprep.subr.mxu0 0.0
    %145 = vmatpush2.msra.mxu0 0.0
    %146 = vmatprep.subr.mxu0 0.0
    %147 = vmatpush2.msra.mxu0 0.0
    %148 = vmatprep.subr.mxu0 0.0
    %149 = vmatpush2.msra.mxu0 0.0
    %150 = vmatprep.subr.mxu0 0.0
    %151 = vmatpush2.msra.mxu0 0.0
    %152 = vmatprep.subr.mxu0 0.0
    %153 = vmatpush2.msra.mxu0 0.0
    %154 = vmatprep.subr.mxu0 0.0
    %155 = vmatpush2.msra.mxu0 0.0
    %156 = vmatprep.mubr.f32.mxu0 0.0
    %157 = vmatmul.mubr.f32.gmra.mxu0 %v90
    %v158 = vpop.f32.mrf.mxu0
    %v159 = vadd.f32 0.0, %v158
    %v160 = vpop.f32.mrf.mxu0
    %161 = vdwg.mxu0
    %v163 = vsel %vm88, %v78, 0
    %165 = vmatprep.subr.mxu0 0.0
    %166 = vmatpush1.msra.mxu0 0.0
    %167 = vmatprep.subr.mxu0 0.0
    %168 = vmatpush1.msra.mxu0 0.0
    %169 = vmatprep.subr.mxu0 0.0
    %170 = vmatpush1.msra.mxu0 0.0
    %171 = vmatprep.subr.mxu0 0.0
    %172 = vmatpush1.msra.mxu0 0.0
    %173 = vmatprep.subr.mxu0 0.0
    %174 = vmatpush1.msra.mxu0 0.0
    %175 = vmatprep.subr.mxu0 0.0
    %176 = vmatpush1.msra.mxu0 0.0
    %177 = vmatprep.subr.mxu0 0.0
    %178 = vmatpush1.msra.mxu0 0.0
    %179 = vmatprep.subr.mxu0 0.0
    %180 = vmatpush1.msra.mxu0 0.0
    %181 = vmatprep.subr.mxu0 0.0
    %182 = vmatpush1.msra.mxu0 0.0
    %183 = vmatprep.subr.mxu0 0.0
    %184 = vmatpush1.msra.mxu0 0.0
    %185 = vmatprep.subr.mxu0 0.0
    %186 = vmatpush1.msra.mxu0 0.0
    %187 = vmatprep.subr.mxu0 0.0
    %188 = vmatpush1.msra.mxu0 0.0
    %189 = vmatprep.subr.mxu0 0.0
    %190 = vmatpush1.msra.mxu0 %v82
    %191 = vmatprep.subr.mxu0 0.0
    %192 = vmatpush1.msra.mxu0 %v81
    %193 = vmatprep.subr.mxu0 0.0
    %194 = vmatpush1.msra.mxu0 %v80
    %195 = vmatprep.subr.mxu0 0.0
    %196 = vmatpush1.msra.mxu0 %v79
    %197 = vmatprep.subr.mxu0 0.0
    %198 = vmatpush2.msra.mxu0 0.0
    %199 = vmatprep.subr.mxu0 0.0
    %200 = vmatpush2.msra.mxu0 0.0
    %201 = vmatprep.subr.mxu0 0.0
    %202 = vmatpush2.msra.mxu0 0.0
    %203 = vmatprep.subr.mxu0 0.0
    %204 = vmatpush2.msra.mxu0 0.0
    %205 = vmatprep.subr.mxu0 0.0
    %206 = vmatpush2.msra.mxu0 0.0
    %207 = vmatprep.subr.mxu0 0.0
    %208 = vmatpush2.msra.mxu0 0.0
    %209 = vmatprep.subr.mxu0 0.0
    %210 = vmatpush2.msra.mxu0 0.0
    %211 = vmatprep.subr.mxu0 0.0
    %212 = vmatpush2.msra.mxu0 0.0
    %213 = vmatprep.subr.mxu0 0.0
    %214 = vmatpush2.msra.mxu0 0.0
    %215 = vmatprep.subr.mxu0 0.0
    %216 = vmatpush2.msra.mxu0 0.0
    %217 = vmatprep.subr.mxu0 0.0
    %218 = vmatpush2.msra.mxu0 0.0
    %219 = vmatprep.subr.mxu0 0.0
    %220 = vmatpush2.msra.mxu0 0.0
    %221 = vmatprep.subr.mxu0 0.0
    %222 = vmatpush2.msra.mxu0 0.0
    %223 = vmatprep.subr.mxu0 0.0
    %224 = vmatpush2.msra.mxu0 0.0
    %225 = vmatprep.subr.mxu0 0.0
    %226 = vmatpush2.msra.mxu0 0.0
    %227 = vmatprep.subr.mxu0 0.0
    %228 = vmatpush2.msra.mxu0 0.0
    %229 = vmatprep.mubr.f32.mxu0 0.0
    %230 = vmatmul.mubr.f32.gmra.mxu0 %v163
    %v231 = vpop.f32.mrf.mxu0
    %v232 = vadd.f32 %v159, %v231
    %v233 = vpop.f32.mrf.mxu0
    %234 = vdwg.mxu0
    %v235 = vld [vmem:[%s4] sm:$0x1]
    %v237 = vlaneseq
    %v238 = vshrl.u32 %v237, 7
    %v239 = vsub.s32 0, %v238
    %v240 = vrot.slane %v235, %v239
    %v242 = vadd.f32 %v232, %v240
    %v243 = vmax.f32 %v242, 0.0
    %v244 = vld [vmem:[%s5] sm:$0x1]
    %v246 = vlaneseq
    %v247 = vshrl.u32 %v246, 7
    %v248 = vsub.s32 0, %v247
    %v249 = vrot.slane %v244, %v248
    %v251 = vmul.f32 %v243, %v249
    %252 = vadd.xlane.f32.xlu0 %v251
    %v253 = vpop.xlane.xlu0 %252
    %s254 = sld [smem:[#allocation2]]
    %v255 = vstv %s254
    %v256 = vadd.f32 %v253, %v255
    %vm257 = vcmask 7168
    %258 = vst.msk [vmem:[%s7] sm:$0xff] %vm257, %v256
    // Predicated region
    $region46: #{tpu_custom_call.1} parent=1 // pred_check
      _
    $region47: #{tpu_custom_call.1} parent=1 // pred_check_branch
      %260 = sbr.rel (0) target = $region49
    $region48: #{tpu_custom_call.1} parent=1 // pred_region
      _
    $region49: #{tpu_custom_call.1} parent=1 // pred_fallthru
      _
    // Predicated region
    $region50: #{tpu_custom_call.1} parent=1 // pred_check
      _
    $region51: #{tpu_custom_call.1} parent=1 // pred_check_branch
      %262 = sbr.rel (0) target = $region53
    $region52: #{tpu_custom_call.1} parent=1 // pred_region
      _
    $region53: #{tpu_custom_call.1} parent=1 // pred_fallthru
      _
    %263 = vsyncpa [#allocation4], 1
    %264 = vsyncpa [#allocation6], 1
    %265 = vsyncpa [#allocation9], 1

</llo_original>
